<compile_context>
chip_gen: v7x
topology: tpu7x:2x2x1
jax: 0.10.0
libtpu: 0.0.40
codegen_flags: <defaults>
</compile_context>

<pallas_src>
import jax
import jax.numpy as jnp
from jax.experimental import pallas as pl
from jax.experimental.pallas import tpu as pltpu


def _capture_kernel(x_ref, buf_ref):
    # Pure copy: one load, one store per tile.
    buf_ref[...] = x_ref[...]


def _choose_width(n_elems: int, last_dim: int) -> int:
    """Pick a lane-dense (multiple-of-128) row width that divides the flat size."""
    if last_dim % 128 == 0:
        return last_dim
    for w in (8192, 4096, 2048, 1024, 512, 256, 128):
        if n_elems % w == 0:
            return w
    # Fall back: keep the original last dim (block width == full dim is legal,
    # stores are lane-masked — only hit for odd shapes, usually tiny anyway).
    return last_dim


def _pallas_capture(x: jax.Array) -> jax.Array:
    """Bit-exact HBM copy of `x` via a lane-dense tiled Pallas copy kernel."""
    orig_shape = x.shape
    n = x.size
    itemsize = jnp.dtype(x.dtype).itemsize

    width = _choose_width(n, orig_shape[-1] if x.ndim >= 1 else 1)
    rows = n // width
    x2 = x.reshape(rows, width)  # contiguous row-major re-view (no data movement)

    # ~2 MiB per block, rows-per-block a multiple of 8 (sublane tiling rule),
    # or the full row extent when the slab is small.
    target_bytes = 2 * 1024 * 1024
    row_bytes = width * itemsize
    block_rows = max(8, (max(1, target_bytes // row_bytes) // 8) * 8)
    if block_rows >= rows:
        block_rows = rows  # full extent — always layout-legal

    num_blocks = pl.cdiv(rows, block_rows)
    spec = pl.BlockSpec((block_rows, width), lambda i: (i, 0))

    buf2 = pl.pallas_call(
        _capture_kernel,
        out_shape=jax.ShapeDtypeStruct((rows, width), x.dtype),
        grid_spec=pltpu.PrefetchScalarGridSpec(
            num_scalar_prefetch=0,
            grid=(num_blocks,),
            in_specs=[spec],
            out_specs=spec,
        ),
        compiler_params=pltpu.CompilerParams(
            dimension_semantics=("parallel",),  # shard rows across TCs on v7x
        ),
    )(x2)
    return buf2.reshape(orig_shape)


def probe_reporting_module(hidden_states: jax.Array, *, min_bytes_for_pallas: int = 1 << 20):
    """Returns (hidden_states_out, buffer).

    Forward output is the input array itself (identity, zero copies).  The
    buffer is a materialized copy via the Pallas kernel, unless the input is
    tiny, in which case returning the same immutable array is both faithful
    (PyTorch stores a reference) and far cheaper than a kernel launch.
    """
    nbytes = hidden_states.size * jnp.dtype(hidden_states.dtype).itemsize
    if nbytes < min_bytes_for_pallas:
        # TODO(synk): stateful `self.buffer` attribute has no functional
        # equivalent; the captured activation is returned instead.
        return hidden_states, hidden_states
    return hidden_states, _pallas_capture(hidden_states)


if __name__ == "__main__":
    key = jax.random.PRNGKey(0)
    batch, seq, hidden = 2, 8, 32
    hidden_states = jax.random.normal(key, (batch, seq, hidden), dtype=jnp.float32)

    # Default path for tiny inputs: no kernel launch, reference-like capture.
    out_fast, buf_fast = probe_reporting_module(hidden_states)

    # Force the Pallas path once so the copy kernel itself is exercised.
    out, buf = probe_reporting_module(hidden_states, min_bytes_for_pallas=0)
    jax.block_until_ready((out, buf, out_fast, buf_fast))

    assert out.shape == hidden_states.shape and out.dtype == hidden_states.dtype
    assert buf.shape == hidden_states.shape and buf.dtype == hidden_states.dtype
    assert bool(jnp.array_equal(out, hidden_states))
    assert bool(jnp.array_equal(buf, hidden_states))
    assert bool(jnp.array_equal(out_fast, hidden_states))
    assert bool(jnp.array_equal(buf_fast, hidden_states))

    print("KERNEL_OK")
</pallas_src>

<mosaic_0001>
module attributes {stable_mosaic.version = 11 : i64} {
  func.func @_capture_kernel(%arg0: i32, %arg1: memref<1x512xf32, #tpu.memory_space<vmem>>, %arg2: memref<1x512xf32, #tpu.memory_space<vmem>>) attributes {dimension_semantics = [#tpu.dimension_semantics<parallel>], iteration_bounds = array<i64: 1>, scalar_prefetch = 0 : i64, scratch_operands = 0 : i64, tpu.core_type = #tpu.core_type<tc>, window_params = [{transform_indices = @transform_0, window_bounds = array<i64: 1, 512>}, {transform_indices = @transform_1, window_bounds = array<i64: 1, 512>}]} {
    %c0 = arith.constant 0 : index
    %c0_0 = arith.constant 0 : index
    %0 = vector.load %arg1[%c0, %c0_0] : memref<1x512xf32, #tpu.memory_space<vmem>>, vector<1x512xf32>
    %c0_1 = arith.constant 0 : index
    %c0_2 = arith.constant 0 : index
    %1 = vector.load %arg2[%c0_1, %c0_2] : memref<1x512xf32, #tpu.memory_space<vmem>>, vector<1x512xf32>
    tpu.vector_store %arg2[%c0_1, %c0_2], %0 {strides = array<i32>} : memref<1x512xf32, #tpu.memory_space<vmem>>, vector<1x512xf32>,
    return
  }
  func.func @transform_0(%arg0: i32) -> (i32, i32) {
    %c0_i32 = arith.constant 0 : i32
    %c0_i32_0 = arith.constant 0 : i32
    return %arg0, %c0_i32 : i32, i32
  }
  func.func @transform_1(%arg0: i32) -> (i32, i32) {
    %c0_i32 = arith.constant 0 : i32
    %c0_i32_0 = arith.constant 0 : i32
    return %arg0, %c0_i32 : i32, i32
  }
}

</mosaic_0001>

<llo_original>
// kernel: tpu_custom_call.1
$region0: #{tpu_custom_call.1}
  #allocation0 [shape = 'u32[]', space=smem, size = 0x4, offset = 0x4, fixed_abs, tag = 'smem constant byte address 0x4 - core index']
  #allocation1 [shape = 'u32[144,128]{1,0:T(1,128)}', space=vmem, size = 0x12000, scoped, tag = 'internal scratch']
  %s0 = inlined_call_operand.hbm [shape: f32[1,512], index: 0, kind: input, shape index: {}]
  %s1 = inlined_call_operand.hbm [shape: f32[1,512], index: 1, kind: output, shape index: {}]
  %s2 = sld [smem:[#allocation0]]
  $region18: #{tpu_custom_call.1} parent=0
    _
  %s4 = ssub.s32 1, %s2
  %s5 = scalar_select 0, %s4, %s2
  $region1: #{tpu_custom_call.1} parent=0
    #allocation2 [shape = 'u8[2048]{0}', space=vmem, size = 0x800, scoped, tag = 'input window, operand 0, single buffered']
    #allocation3 [shape = 's32[1]{0}', space=sflag, size = 0x4, scoped, tag = 'scoped memory for tpu_custom_call.1']
    #allocation4 [shape = 's32[1]{0}', space=sflag, size = 0x4, scoped, tag = 'scoped memory for tpu_custom_call.1']
    #allocation5 [shape = 'u8[2048]{0}', space=vmem, size = 0x800, scoped, tag = 'output window, operand 0, single buffered']
    %6 = vsyncpa [#allocation3], 0
    %7 = vsyncpa [#allocation4], 0
    // Predicated region
    $region2: #{tpu_custom_call.1} parent=1 // pred_check
      _
    $region3: #{tpu_custom_call.1} parent=1 // pred_check_branch
      %9 = sbr.rel (0) target = $region5
    $region4: #{tpu_custom_call.1} parent=1 // pred_region
      %s11 = ssub.s32 64, 64
      %12 = vsyncadd [#allocation3], %s11
      %s14 = sshll.u32 [#allocation2], 4
      %s15 = int_to_ptr.vmem [resolvable:$true] %s14
      %17 = dma.hbm_to_vmem [thread:$0]  %s0, 64, %s15, [#allocation3]
    $region5: #{tpu_custom_call.1} parent=1 // pred_fallthru
      _
    // Predicated region
    $region6: #{tpu_custom_call.1} parent=1 // pred_check
      _
    $region7: #{tpu_custom_call.1} parent=1 // pred_check_branch
      %19 = sbr.rel (0) target = $region9
    $region8: #{tpu_custom_call.1} parent=1 // pred_region
      %20 = dma.done [#allocation3], 64
    $region9: #{tpu_custom_call.1} parent=1 // pred_fallthru
      _
    %v21 = vld [vmem:[#allocation2] sm:$0xf]
    %v22 = vlaneseq
    %vm23 = vcmp.ge.s32.totalorder %v22, 0
    %vm24 = vcmp.lt.s32.totalorder %v22, 512
    %vm25 = vmand %vm23, %vm24
    %26 = vst.msk [vmem:[#allocation5] sm:$0xf] %vm25, %v21
    // Predicated region
    $region10: #{tpu_custom_call.1} parent=1 // pred_check
      _
    $region11: #{tpu_custom_call.1} parent=1 // pred_check_branch
      %28 = sbr.rel (0) target = $region13
    $region12: #{tpu_custom_call.1} parent=1 // pred_region
      %s30 = ssub.s32 64, 64
      %31 = vsyncadd [#allocation4], %s30
      %s33 = sshll.u32 [#allocation5], 4
      %s34 = int_to_ptr.vmem [resolvable:$true] %s33
      %36 = dma.vmem_to_hbm [thread:$0]  %s34, 64, %s1, [#allocation4]
    $region13: #{tpu_custom_call.1} parent=1 // pred_fallthru
      _
    // Predicated region
    $region14: #{tpu_custom_call.1} parent=1 // pred_check
      _
    $region15: #{tpu_custom_call.1} parent=1 // pred_check_branch
      %38 = sbr.rel (0) target = $region17
    $region16: #{tpu_custom_call.1} parent=1 // pred_region
      %39 = dma.done [#allocation4], 64
    $region17: #{tpu_custom_call.1} parent=1 // pred_fallthru
      _
    %40 = vsyncpa [#allocation3], 1
    %41 = vsyncpa [#allocation4], 1

</llo_original>
